<compile_context>
chip_gen: v7x
topology: tpu7x:2x2x1
jax: 0.10.0
libtpu: 0.0.40
codegen_flags: <defaults>
</compile_context>

<pallas_src>
import math

import jax
import jax.numpy as jnp
from jax.experimental import pallas as pl
from jax.experimental.pallas import tpu as pltpu


def _round_up(x, m):
    return (x + m - 1) // m * m


def _cdiv(a, b):
    return (a + b - 1) // b


def simple_mlp_kernel(x_ref, w1r_ref, b1_ref, w2_ref, b2_ref, w3_ref, b3_ref,
                      o_ref, acc_ref):
    j = pl.program_id(1)

    @pl.when(j == 0)
    def _init():
        acc_ref[...] = jnp.zeros_like(acc_ref)

    # mean-over-S fused with fc1 on the MXU: W1_rep already carries the 1/S
    # scale, so each step adds this S-chunk's scaled fc1 contribution.
    acc_ref[...] += jnp.dot(x_ref[...], w1r_ref[...],
                            preferred_element_type=jnp.float32)

    @pl.when(j == pl.num_programs(1) - 1)
    def _finalize():
        h1 = jnp.maximum(acc_ref[...] + b1_ref[...], 0.0)          # (TB, H1) f32
        h2 = jnp.dot(h1.astype(w2_ref.dtype), w2_ref[...],
                     preferred_element_type=jnp.float32)
        h2 = jnp.maximum(h2 + b2_ref[...], 0.0)
        out = jnp.dot(h2.astype(w3_ref.dtype), w3_ref[...],
                      preferred_element_type=jnp.float32)
        o_ref[...] = (out + b3_ref[...]).astype(o_ref.dtype)        # lane-dense vst


def _choose_tb(B, target=256):
    """Batch tile: multiple of 8, <= target, >= 2 blocks when possible
    (v7x: 2 TensorCores share the 'parallel' batch axis), minimal padding.
    (On v5e a 128-row target already fills its 128x128 MXU; the kernel is
    mem-bound so the difference is marginal.)"""
    b_pad8 = _round_up(B, 8)
    if b_pad8 <= 8:
        return 8
    n_blocks = max(2, _cdiv(B, target))
    return min(_round_up(_cdiv(B, n_blocks), 8), _round_up(target, 8))


def simple_mlp(x, w1, b1, w2, b2, w3, b3, *,
               tb_target=256, max_tile_cols=2048,
               x_dtype=jnp.bfloat16, weight_dtype=jnp.bfloat16):
    """x: (B, S, D_in); w*: (in, out); b*: (1, out). Returns (B, D_out) f32.

    Computes fc3(relu(fc2(relu(fc1(mean_S(x)))))) == SimpleMLP.forward.
    """
    B, S, d_in = x.shape
    h1_dim, h2_dim, d_out = w1.shape[1], w2.shape[1], w3.shape[1]

    # ---- feature padding: full MXU tiles + lane-dense output store ----------
    hp1 = _round_up(h1_dim, 128)
    hp2 = _round_up(h2_dim, 128)
    op = _round_up(d_out, 128)

    # ---- tiling --------------------------------------------------------------
    tb = _choose_tb(B, tb_target)
    b_p = _round_up(B, tb)

    # Columns of the flattened x per grid step: ts rows of S, with ts chosen so
    # ts*d_in is a multiple of 128 (lane-dense x tile, MXU-friendly contraction),
    # capped at ~max_tile_cols lanes per tile.
    ts_unit = math.lcm(128, d_in) // d_in
    cols_unit = ts_unit * d_in
    k = max(1, min(_cdiv(S, ts_unit), max_tile_cols // cols_unit))
    ts = ts_unit * k
    s_p = _round_up(S, ts)
    tc = ts * d_in

    # ---- operands ------------------------------------------------------------
    # Fold the mean's 1/S into W1 (in f32, per review), then replicate it ts
    # times so x_tile @ W1_rep is exactly this S-chunk's contribution.
    w1_f32 = w1.astype(jnp.float32) * jnp.float32(1.0 / S)
    w1p = jnp.zeros((d_in, hp1), jnp.float32).at[:, :h1_dim].set(w1_f32)
    w1r = jnp.tile(w1p, (ts, 1)).astype(weight_dtype)               # (tc, hp1)
    w2p = (jnp.zeros((hp1, hp2), jnp.float32)
           .at[:h1_dim, :h2_dim].set(w2.astype(jnp.float32)).astype(weight_dtype))
    w3p = (jnp.zeros((hp2, op), jnp.float32)
           .at[:h2_dim, :d_out].set(w3.astype(jnp.float32)).astype(weight_dtype))
    b1p = jnp.zeros((1, hp1), jnp.float32).at[:, :h1_dim].set(b1.astype(jnp.float32))
    b2p = jnp.zeros((1, hp2), jnp.float32).at[:, :h2_dim].set(b2.astype(jnp.float32))
    b3p = jnp.zeros((1, op), jnp.float32).at[:, :d_out].set(b3.astype(jnp.float32))

    # x streamed as bf16 by default (halves the dominant HBM term). Zero padding
    # (batch rows and S rows) contributes nothing through the matmul.
    x_flat = x.reshape(B, S * d_in).astype(x_dtype)
    x_p = jnp.zeros((b_p, s_p * d_in), x_dtype).at[:B, :S * d_in].set(x_flat)

    grid = (b_p // tb, s_p // ts)

    # ---- VMEM budget / cost hints --------------------------------------------
    wbytes = jnp.dtype(weight_dtype).itemsize
    xbytes = jnp.dtype(x_dtype).itemsize
    resident = ((tc * hp1 + hp1 * hp2 + hp2 * op) * wbytes
                + (hp1 + hp2 + op) * 4)
    vmem_need = (2 * resident               # x2 covers the double-buffer fallback
                 + 2 * tb * tc * xbytes     # pipelined x tiles
                 + 2 * tb * op * 4          # resident output block
                 + tb * hp1 * 4)            # accumulator scratch
    # Floor at 16 MiB (>= every generation's scoped default), cap at 64 MiB
    # (v7x physical) so the request is valid everywhere.
    vmem_limit = int(min(max(vmem_need + (4 << 20), 16 << 20), 64 << 20))

    flops = 2 * b_p * (s_p * d_in) * hp1 + 2 * b_p * (hp1 * hp2 + hp2 * op)
    bytes_accessed = (x_p.size * xbytes
                      + (w1r.size + w2p.size + w3p.size) * wbytes
                      + (b1p.size + b2p.size + b3p.size) * 4
                      + b_p * op * 4)
    cost = pl.CostEstimate(flops=int(flops), transcendentals=0,
                           bytes_accessed=int(bytes_accessed))

    def run(single_buffer_weights):
        if single_buffer_weights:
            # Grid-invariant blocks gain nothing from double buffering; keep a
            # single VMEM copy so the budget goes to bigger x tiles instead.
            wkw = dict(pipeline_mode=pl.Buffered(1))
        else:
            wkw = {}

        grid_spec = pltpu.PrefetchScalarGridSpec(
            num_scalar_prefetch=0,
            grid=grid,
            in_specs=[
                # x: pipelined lane-dense (TB, ts*D_in) tiles.
                pl.BlockSpec((tb, tc), lambda i, j: (i, j)),
                # Weights / biases: grid-invariant -> VMEM-resident.
                pl.BlockSpec((tc, hp1), lambda i, j: (0, 0), **wkw),
                pl.BlockSpec((1, hp1), lambda i, j: (0, 0), **wkw),
                pl.BlockSpec((hp1, hp2), lambda i, j: (0, 0), **wkw),
                pl.BlockSpec((1, hp2), lambda i, j: (0, 0), **wkw),
                pl.BlockSpec((hp2, op), lambda i, j: (0, 0), **wkw),
                pl.BlockSpec((1, op), lambda i, j: (0, 0), **wkw),
            ],
            # Output block constant over the S axis (accumulator-resident).
            out_specs=pl.BlockSpec((tb, op), lambda i, j: (i, 0)),
            scratch_shapes=[pltpu.VMEM((tb, hp1), jnp.float32)],
        )

        out = pl.pallas_call(
            simple_mlp_kernel,
            out_shape=jax.ShapeDtypeStruct((b_p, op), jnp.float32),
            grid_spec=grid_spec,
            compiler_params=pltpu.CompilerParams(
                dimension_semantics=("parallel", "arbitrary"),
                vmem_limit_bytes=vmem_limit),
            cost_estimate=cost,
        )(x_p, w1r, b1p, w2p, b2p, w3p, b3p)
        return jax.block_until_ready(out)

    try:
        out_p = run(True)
    except Exception:
        # This JAX build rejected pipeline_mode=pl.Buffered(1); fall back to the
        # default (double-buffered) invariant weights — correct, slightly more VMEM.
        out_p = run(False)

    return out_p[:B, :d_out]


def _init_linear(key, fan_in, fan_out):
    """Deterministic init mimicking nn.Linear's uniform(-1/sqrt(fan_in), +)."""
    kw, kb = jax.random.split(key)
    bound = 1.0 / (fan_in ** 0.5)
    w = jax.random.uniform(kw, (fan_in, fan_out), jnp.float32, -bound, bound)
    b = jax.random.uniform(kb, (1, fan_out), jnp.float32, -bound, bound)
    return w, b


if __name__ == "__main__":
    # Small shapes consistent with the forward pass (mean taken over dim=1).
    B, S = 2, 8
    input_dim, hidden_dim, output_dim = 16, 32, 8

    key = jax.random.PRNGKey(0)
    kx, k1, k2, k3 = jax.random.split(key, 4)

    x = jax.random.normal(kx, (B, S, input_dim), jnp.float32)
    w1, b1 = _init_linear(k1, input_dim, hidden_dim)
    w2, b2 = _init_linear(k2, hidden_dim, hidden_dim)
    w3, b3 = _init_linear(k3, hidden_dim, output_dim)

    # Pure-JAX reference (f32).
    xm = jnp.mean(x, axis=1)
    ref = jnp.maximum(xm @ w1 + b1, 0.0)
    ref = jnp.maximum(ref @ w2 + b2, 0.0)
    ref = ref @ w3 + b3

    # f32 path: tight numerical check of the kernel structure.
    out_f32 = simple_mlp(x, w1, b1, w2, b2, w3, b3,
                         x_dtype=jnp.float32, weight_dtype=jnp.float32)
    out_f32 = jax.block_until_ready(out_f32)
    assert out_f32.shape == (B, output_dim)
    assert jnp.allclose(out_f32, ref, atol=1e-3, rtol=1e-3)

    # Default (perf) path: bf16 x stream + bf16 resident weights, f32 accumulate.
    out_bf16 = simple_mlp(x, w1, b1, w2, b2, w3, b3)
    out_bf16 = jax.block_until_ready(out_bf16)
    assert out_bf16.shape == (B, output_dim)
    assert jnp.allclose(out_bf16, ref, atol=3e-2, rtol=3e-2)

    print("KERNEL_OK")
</pallas_src>

<mosaic_0001>
module attributes {stable_mosaic.version = 11 : i64} {
  func.func @simple_mlp_kernel(%arg0: i32, %arg1: i32, %arg2: memref<8x128xf32, #tpu.memory_space<vmem>>, %arg3: memref<128x128xf32, #tpu.memory_space<vmem>>, %arg4: memref<1x128xf32, #tpu.memory_space<vmem>>, %arg5: memref<128x128xf32, #tpu.memory_space<vmem>>, %arg6: memref<1x128xf32, #tpu.memory_space<vmem>>, %arg7: memref<128x128xf32, #tpu.memory_space<vmem>>, %arg8: memref<1x128xf32, #tpu.memory_space<vmem>>, %arg9: memref<8x128xf32, #tpu.memory_space<vmem>>, %arg10: memref<8x128xf32, #tpu.memory_space<vmem>>) attributes {dimension_semantics = [#tpu.dimension_semantics<parallel>, #tpu.dimension_semantics<arbitrary>], iteration_bounds = array<i64: 1, 1>, scalar_prefetch = 0 : i64, scratch_operands = 1 : i64, tpu.core_type = #tpu.core_type<tc>, window_params = [{transform_indices = @transform_0, window_bounds = array<i64: 8, 128>}, {pipeline_mode = #tpu.pipeline_mode<synchronous>, transform_indices = @transform_1, window_bounds = array<i64: 128, 128>}, {pipeline_mode = #tpu.pipeline_mode<synchronous>, transform_indices = @transform_2, window_bounds = array<i64: 1, 128>}, {pipeline_mode = #tpu.pipeline_mode<synchronous>, transform_indices = @transform_3, window_bounds = array<i64: 128, 128>}, {pipeline_mode = #tpu.pipeline_mode<synchronous>, transform_indices = @transform_4, window_bounds = array<i64: 1, 128>}, {pipeline_mode = #tpu.pipeline_mode<synchronous>, transform_indices = @transform_5, window_bounds = array<i64: 128, 128>}, {pipeline_mode = #tpu.pipeline_mode<synchronous>, transform_indices = @transform_6, window_bounds = array<i64: 1, 128>}, {transform_indices = @transform_7, window_bounds = array<i64: 8, 128>}]} {
    %c0_i32 = arith.constant 0 : i32
    %0 = arith.cmpi eq, %arg1, %c0_i32 : i32
    %1 = arith.extui %0 : i1 to i32
    %c0_i32_0 = arith.constant 0 : i32
    %2 = arith.cmpi ne, %1, %c0_i32_0 : i32
    scf.if %2 {
      %cst_10 = arith.constant 0.000000e+00 : f32
      %12 = vector.broadcast %cst_10 : f32 to vector<8x128xf32>
      %c0_11 = arith.constant 0 : index
      %c0_12 = arith.constant 0 : index
      %13 = vector.load %arg10[%c0_11, %c0_12] : memref<8x128xf32, #tpu.memory_space<vmem>>, vector<8x128xf32>
      tpu.vector_store %arg10[%c0_11, %c0_12], %12 {strides = array<i32>} : memref<8x128xf32, #tpu.memory_space<vmem>>, vector<8x128xf32>,
    } else {
    }
    %c0 = arith.constant 0 : index
    %c0_1 = arith.constant 0 : index
    %3 = vector.load %arg10[%c0, %c0_1] : memref<8x128xf32, #tpu.memory_space<vmem>>, vector<8x128xf32>
    %c0_2 = arith.constant 0 : index
    %c0_3 = arith.constant 0 : index
    %4 = vector.load %arg2[%c0_2, %c0_3] : memref<8x128xf32, #tpu.memory_space<vmem>>, vector<8x128xf32>
    %c0_4 = arith.constant 0 : index
    %c0_5 = arith.constant 0 : index
    %5 = vector.load %arg3[%c0_4, %c0_5] : memref<128x128xf32, #tpu.memory_space<vmem>>, vector<128x128xf32>
    %cst = arith.constant dense<0.000000e+00> : vector<8x128xf32>
    %6 = tpu.matmul %4, %5, %cst {dimension_numbers = #tpu.dot_dimension_numbers<[1], [0], [0], [1], [0, 0, 1, 1], [], []>} : vector<8x128xf32>, vector<128x128xf32>, vector<8x128xf32> -> vector<8x128xf32>
    %7 = arith.addf %3, %6 : vector<8x128xf32>
    %c0_6 = arith.constant 0 : index
    %c0_7 = arith.constant 0 : index
    %8 = vector.load %arg10[%c0_6, %c0_7] : memref<8x128xf32, #tpu.memory_space<vmem>>, vector<8x128xf32>
    tpu.vector_store %arg10[%c0_6, %c0_7], %7 {strides = array<i32>} : memref<8x128xf32, #tpu.memory_space<vmem>>, vector<8x128xf32>,
    %c0_i32_8 = arith.constant 0 : i32
    %9 = arith.cmpi eq, %arg1, %c0_i32_8 : i32
    %10 = arith.extui %9 : i1 to i32
    %c0_i32_9 = arith.constant 0 : i32
    %11 = arith.cmpi ne, %10, %c0_i32_9 : i32
    scf.if %11 {
      %c0_10 = arith.constant 0 : index
      %c0_11 = arith.constant 0 : index
      %12 = vector.load %arg10[%c0_10, %c0_11] : memref<8x128xf32, #tpu.memory_space<vmem>>, vector<8x128xf32>
      %c0_12 = arith.constant 0 : index
      %c0_13 = arith.constant 0 : index
      %13 = vector.load %arg4[%c0_12, %c0_13] : memref<1x128xf32, #tpu.memory_space<vmem>>, vector<1x128xf32>
      %14 = vector.broadcast %13 : vector<1x128xf32> to vector<8x128xf32>
      %15 = arith.addf %12, %14 : vector<8x128xf32>
      %cst_14 = arith.constant 0.000000e+00 : f32
      %16 = vector.broadcast %cst_14 : f32 to vector<8x128xf32>
      %17 = arith.maximumf %15, %16 : vector<8x128xf32>
      %c0_15 = arith.constant 0 : index
      %c0_16 = arith.constant 0 : index
      %18 = vector.load %arg5[%c0_15, %c0_16] : memref<128x128xf32, #tpu.memory_space<vmem>>, vector<128x128xf32>
      %cst_17 = arith.constant dense<0.000000e+00> : vector<8x128xf32>
      %19 = tpu.matmul %17, %18, %cst_17 {dimension_numbers = #tpu.dot_dimension_numbers<[1], [0], [0], [1], [0, 0, 1, 1], [], []>} : vector<8x128xf32>, vector<128x128xf32>, vector<8x128xf32> -> vector<8x128xf32>
      %c0_18 = arith.constant 0 : index
      %c0_19 = arith.constant 0 : index
      %20 = vector.load %arg6[%c0_18, %c0_19] : memref<1x128xf32, #tpu.memory_space<vmem>>, vector<1x128xf32>
      %21 = vector.broadcast %20 : vector<1x128xf32> to vector<8x128xf32>
      %22 = arith.addf %19, %21 : vector<8x128xf32>
      %cst_20 = arith.constant 0.000000e+00 : f32
      %23 = vector.broadcast %cst_20 : f32 to vector<8x128xf32>
      %24 = arith.maximumf %22, %23 : vector<8x128xf32>
      %c0_21 = arith.constant 0 : index
      %c0_22 = arith.constant 0 : index
      %25 = vector.load %arg7[%c0_21, %c0_22] : memref<128x128xf32, #tpu.memory_space<vmem>>, vector<128x128xf32>
      %cst_23 = arith.constant dense<0.000000e+00> : vector<8x128xf32>
      %26 = tpu.matmul %24, %25, %cst_23 {dimension_numbers = #tpu.dot_dimension_numbers<[1], [0], [0], [1], [0, 0, 1, 1], [], []>} : vector<8x128xf32>, vector<128x128xf32>, vector<8x128xf32> -> vector<8x128xf32>
      %c0_24 = arith.constant 0 : index
      %c0_25 = arith.constant 0 : index
      %27 = vector.load %arg8[%c0_24, %c0_25] : memref<1x128xf32, #tpu.memory_space<vmem>>, vector<1x128xf32>
      %28 = vector.broadcast %27 : vector<1x128xf32> to vector<8x128xf32>
      %29 = arith.addf %26, %28 : vector<8x128xf32>
      %c0_26 = arith.constant 0 : index
      %c0_27 = arith.constant 0 : index
      %30 = vector.load %arg9[%c0_26, %c0_27] : memref<8x128xf32, #tpu.memory_space<vmem>>, vector<8x128xf32>
      tpu.vector_store %arg9[%c0_26, %c0_27], %29 {strides = array<i32>} : memref<8x128xf32, #tpu.memory_space<vmem>>, vector<8x128xf32>,
    } else {
    }
    return
  }
  func.func @transform_0(%arg0: i32, %arg1: i32) -> (i32, i32) {
    %c0_i32 = arith.constant 0 : i32
    return %arg0, %arg1 : i32, i32
  }
  func.func @transform_1(%arg0: i32, %arg1: i32) -> (i32, i32) {
    %c0_i32 = arith.constant 0 : i32
    %c0_i32_0 = arith.constant 0 : i32
    %c0_i32_1 = arith.constant 0 : i32
    return %c0_i32, %c0_i32_0 : i32, i32
  }
  func.func @transform_2(%arg0: i32, %arg1: i32) -> (i32, i32) {
    %c0_i32 = arith.constant 0 : i32
    %c0_i32_0 = arith.constant 0 : i32
    %c0_i32_1 = arith.constant 0 : i32
    return %c0_i32, %c0_i32_0 : i32, i32
  }
  func.func @transform_3(%arg0: i32, %arg1: i32) -> (i32, i32) {
    %c0_i32 = arith.constant 0 : i32
    %c0_i32_0 = arith.constant 0 : i32
    %c0_i32_1 = arith.constant 0 : i32
    return %c0_i32, %c0_i32_0 : i32, i32
  }
  func.func @transform_4(%arg0: i32, %arg1: i32) -> (i32, i32) {
    %c0_i32 = arith.constant 0 : i32
    %c0_i32_0 = arith.constant 0 : i32
    %c0_i32_1 = arith.constant 0 : i32
    return %c0_i32, %c0_i32_0 : i32, i32
  }
  func.func @transform_5(%arg0: i32, %arg1: i32) -> (i32, i32) {
    %c0_i32 = arith.constant 0 : i32
    %c0_i32_0 = arith.constant 0 : i32
    %c0_i32_1 = arith.constant 0 : i32
    return %c0_i32, %c0_i32_0 : i32, i32
  }
  func.func @transform_6(%arg0: i32, %arg1: i32) -> (i32, i32) {
    %c0_i32 = arith.constant 0 : i32
    %c0_i32_0 = arith.constant 0 : i32
    %c0_i32_1 = arith.constant 0 : i32
    return %c0_i32, %c0_i32_0 : i32, i32
  }
  func.func @transform_7(%arg0: i32, %arg1: i32) -> (i32, i32) {
    %c0_i32 = arith.constant 0 : i32
    %c0_i32_0 = arith.constant 0 : i32
    return %arg0, %c0_i32 : i32, i32
  }
}

module attributes {stable_mosaic.version = 11 : i64} {
  func.func @simple_mlp_kernel(%arg0: i32, %arg1: i32, %arg2: memref<8x128xf32, #tpu.memory_space<vmem>>, %arg3: memref<128x128xf32, #tpu.memory_space<vmem>>, %arg4: memref<1x128xf32, #tpu.memory_space<vmem>>, %arg5: memref<128x128xf32, #tpu.memory_space<vmem>>, %arg6: memref<1x128xf32, #tpu.memory_space<vmem>>, %arg7: memref<128x128xf32, #tpu.memory_space<vmem>>, %arg8: memref<1x128xf32, #tpu.memory_space<vmem>>, %arg9: memref<8x128xf32, #tpu.memory_space<vmem>>, %arg10: memref<8x128xf32, #tpu.memory_space<vmem>>) attributes {dimension_semantics = [#tpu.dimension_semantics<parallel>, #tpu.dimension_semantics<arbitrary>], iteration_bounds = array<i64: 1, 1>, scalar_prefetch = 0 : i64, scratch_operands = 1 : i64, tpu.core_type = #tpu.core_type<tc>, window_params = [{transform_indices = @transform_0, window_bounds = array<i64: 8, 128>}, {pipeline_mode = #tpu.pipeline_mode<synchronous>, transform_indices = @transform_1, window_bounds = array<i64: 128, 128>}, {pipeline_mode = #tpu.pipeline_mode<synchronous>, transform_indices = @transform_2, window_bounds = array<i64: 1, 128>}, {pipeline_mode = #tpu.pipeline_mode<synchronous>, transform_indices = @transform_3, window_bounds = array<i64: 128, 128>}, {pipeline_mode = #tpu.pipeline_mode<synchronous>, transform_indices = @transform_4, window_bounds = array<i64: 1, 128>}, {pipeline_mode = #tpu.pipeline_mode<synchronous>, transform_indices = @transform_5, window_bounds = array<i64: 128, 128>}, {pipeline_mode = #tpu.pipeline_mode<synchronous>, transform_indices = @transform_6, window_bounds = array<i64: 1, 128>}, {transform_indices = @transform_7, window_bounds = array<i64: 8, 128>}]} {
    %c0_i32 = arith.constant 0 : i32
    %0 = arith.cmpi eq, %arg1, %c0_i32 : i32
    %1 = arith.extui %0 : i1 to i32
    %c0_i32_0 = arith.constant 0 : i32
    %2 = arith.cmpi ne, %1, %c0_i32_0 : i32
    scf.if %2 {
      %cst_10 = arith.constant 0.000000e+00 : f32
      %12 = vector.broadcast %cst_10 : f32 to vector<8x128xf32>
      %c0_11 = arith.constant 0 : index
      %c0_12 = arith.constant 0 : index
      %13 = vector.load %arg10[%c0_11, %c0_12] : memref<8x128xf32, #tpu.memory_space<vmem>>, vector<8x128xf32>
      tpu.vector_store %arg10[%c0_11, %c0_12], %12 {strides = array<i32>} : memref<8x128xf32, #tpu.memory_space<vmem>>, vector<8x128xf32>,
    } else {
    }
    %c0 = arith.constant 0 : index
    %c0_1 = arith.constant 0 : index
    %3 = vector.load %arg10[%c0, %c0_1] : memref<8x128xf32, #tpu.memory_space<vmem>>, vector<8x128xf32>
    %c0_2 = arith.constant 0 : index
    %c0_3 = arith.constant 0 : index
    %4 = vector.load %arg2[%c0_2, %c0_3] : memref<8x128xf32, #tpu.memory_space<vmem>>, vector<8x128xf32>
    %c0_4 = arith.constant 0 : index
    %c0_5 = arith.constant 0 : index
    %5 = vector.load %arg3[%c0_4, %c0_5] : memref<128x128xf32, #tpu.memory_space<vmem>>, vector<128x128xf32>
    %cst = arith.constant dense<0.000000e+00> : vector<8x128xf32>
    %6 = tpu.matmul %4, %5, %cst {dimension_numbers = #tpu.dot_dimension_numbers<[1], [0], [0], [1], [0, 0, 1, 1], [], []>} : vector<8x128xf32>, vector<128x128xf32>, vector<8x128xf32> -> vector<8x128xf32>
    %7 = arith.addf %3, %6 : vector<8x128xf32>
    %c0_6 = arith.constant 0 : index
    %c0_7 = arith.constant 0 : index
    %8 = vector.load %arg10[%c0_6, %c0_7] : memref<8x128xf32, #tpu.memory_space<vmem>>, vector<8x128xf32>
    tpu.vector_store %arg10[%c0_6, %c0_7], %7 {strides = array<i32>} : memref<8x128xf32, #tpu.memory_space<vmem>>, vector<8x128xf32>,
    %c0_i32_8 = arith.constant 0 : i32
    %9 = arith.cmpi eq, %arg1, %c0_i32_8 : i32
    %10 = arith.extui %9 : i1 to i32
    %c0_i32_9 = arith.constant 0 : i32
    %11 = arith.cmpi ne, %10, %c0_i32_9 : i32
    scf.if %11 {
      %c0_10 = arith.constant 0 : index
      %c0_11 = arith.constant 0 : index
      %12 = vector.load %arg10[%c0_10, %c0_11] : memref<8x128xf32, #tpu.memory_space<vmem>>, vector<8x128xf32>
      %c0_12 = arith.constant 0 : index
      %c0_13 = arith.constant 0 : index
      %13 = vector.load %arg4[%c0_12, %c0_13] : memref<1x128xf32, #tpu.memory_space<vmem>>, vector<1x128xf32>
      %14 = vector.broadcast %13 : vector<1x128xf32> to vector<8x128xf32>
      %15 = arith.addf %12, %14 : vector<8x128xf32>
      %cst_14 = arith.constant 0.000000e+00 : f32
      %16 = vector.broadcast %cst_14 : f32 to vector<8x128xf32>
      %17 = arith.maximumf %15, %16 : vector<8x128xf32>
      %c0_15 = arith.constant 0 : index
      %c0_16 = arith.constant 0 : index
      %18 = vector.load %arg5[%c0_15, %c0_16] : memref<128x128xf32, #tpu.memory_space<vmem>>, vector<128x128xf32>
      %cst_17 = arith.constant dense<0.000000e+00> : vector<8x128xf32>
      %19 = tpu.matmul %17, %18, %cst_17 {dimension_numbers = #tpu.dot_dimension_numbers<[1], [0], [0], [1], [0, 0, 1, 1], [], []>} : vector<8x128xf32>, vector<128x128xf32>, vector<8x128xf32> -> vector<8x128xf32>
      %c0_18 = arith.constant 0 : index
      %c0_19 = arith.constant 0 : index
      %20 = vector.load %arg6[%c0_18, %c0_19] : memref<1x128xf32, #tpu.memory_space<vmem>>, vector<1x128xf32>
      %21 = vector.broadcast %20 : vector<1x128xf32> to vector<8x128xf32>
      %22 = arith.addf %19, %21 : vector<8x128xf32>
      %cst_20 = arith.constant 0.000000e+00 : f32
      %23 = vector.broadcast %cst_20 : f32 to vector<8x128xf32>
      %24 = arith.maximumf %22, %23 : vector<8x128xf32>
      %c0_21 = arith.constant 0 : index
      %c0_22 = arith.constant 0 : index
      %25 = vector.load %arg7[%c0_21, %c0_22] : memref<128x128xf32, #tpu.memory_space<vmem>>, vector<128x128xf32>
      %cst_23 = arith.constant dense<0.000000e+00> : vector<8x128xf32>
      %26 = tpu.matmul %24, %25, %cst_23 {dimension_numbers = #tpu.dot_dimension_numbers<[1], [0], [0], [1], [0, 0, 1, 1], [], []>} : vector<8x128xf32>, vector<128x128xf32>, vector<8x128xf32> -> vector<8x128xf32>
      %c0_24 = arith.constant 0 : index
      %c0_25 = arith.constant 0 : index
      %27 = vector.load %arg8[%c0_24, %c0_25] : memref<1x128xf32, #tpu.memory_space<vmem>>, vector<1x128xf32>
      %28 = vector.broadcast %27 : vector<1x128xf32> to vector<8x128xf32>
      %29 = arith.addf %26, %28 : vector<8x128xf32>
      %c0_26 = arith.constant 0 : index
      %c0_27 = arith.constant 0 : index
      %30 = vector.load %arg9[%c0_26, %c0_27] : memref<8x128xf32, #tpu.memory_space<vmem>>, vector<8x128xf32>
      tpu.vector_store %arg9[%c0_26, %c0_27], %29 {strides = array<i32>} : memref<8x128xf32, #tpu.memory_space<vmem>>, vector<8x128xf32>,
    } else {
    }
    return
  }
  func.func @transform_0(%arg0: i32, %arg1: i32) -> (i32, i32) {
    %c0_i32 = arith.constant 0 : i32
    return %arg0, %arg1 : i32, i32
  }
  func.func @transform_1(%arg0: i32, %arg1: i32) -> (i32, i32) {
    %c0_i32 = arith.constant 0 : i32
    %c0_i32_0 = arith.constant 0 : i32
    %c0_i32_1 = arith.constant 0 : i32
    return %c0_i32, %c0_i32_0 : i32, i32
  }
  func.func @transform_2(%arg0: i32, %arg1: i32) -> (i32, i32) {
    %c0_i32 = arith.constant 0 : i32
    %c0_i32_0 = arith.constant 0 : i32
    %c0_i32_1 = arith.constant 0 : i32
    return %c0_i32, %c0_i32_0 : i32, i32
  }
  func.func @transform_3(%arg0: i32, %arg1: i32) -> (i32, i32) {
    %c0_i32 = arith.constant 0 : i32
    %c0_i32_0 = arith.constant 0 : i32
    %c0_i32_1 = arith.constant 0 : i32
    return %c0_i32, %c0_i32_0 : i32, i32
  }
  func.func @transform_4(%arg0: i32, %arg1: i32) -> (i32, i32) {
    %c0_i32 = arith.constant 0 : i32
    %c0_i32_0 = arith.constant 0 : i32
    %c0_i32_1 = arith.constant 0 : i32
    return %c0_i32, %c0_i32_0 : i32, i32
  }
  func.func @transform_5(%arg0: i32, %arg1: i32) -> (i32, i32) {
    %c0_i32 = arith.constant 0 : i32
    %c0_i32_0 = arith.constant 0 : i32
    %c0_i32_1 = arith.constant 0 : i32
    return %c0_i32, %c0_i32_0 : i32, i32
  }
  func.func @transform_6(%arg0: i32, %arg1: i32) -> (i32, i32) {
    %c0_i32 = arith.constant 0 : i32
    %c0_i32_0 = arith.constant 0 : i32
    %c0_i32_1 = arith.constant 0 : i32
    return %c0_i32, %c0_i32_0 : i32, i32
  }
  func.func @transform_7(%arg0: i32, %arg1: i32) -> (i32, i32) {
    %c0_i32 = arith.constant 0 : i32
    %c0_i32_0 = arith.constant 0 : i32
    return %arg0, %c0_i32 : i32, i32
  }
}

</mosaic_0001>

<llo_original>
// kernel: tpu_custom_call.1
$region0: #{tpu_custom_call.1}
  #allocation0 [shape = 'u32[]', space=smem, size = 0x4, offset = 0x4, fixed_abs, tag = 'smem constant byte address 0x4 - core index']
  #allocation1 [shape = 'u32[144,128]{1,0:T(1,128)}', space=vmem, size = 0x12000, scoped, tag = 'internal scratch']
  #allocation2 [shape = 'f32[8,128]{1,0:T(8,128)}', space=vmem, size = 0x1000, scoped, tag = 'scratch operand']
  %s0 = inlined_call_operand.hbm [shape: f32[8,128], index: 0, kind: input, shape index: {}]
  %s1 = inlined_call_operand.hbm [shape: f32[128,128], index: 1, kind: input, shape index: {}]
  %s2 = inlined_call_operand.vmem [shape: f32[1,128], index: 2, kind: input, shape index: {}]
  %s3 = inlined_call_operand.hbm [shape: f32[128,128], index: 3, kind: input, shape index: {}]
  %s4 = inlined_call_operand.vmem [shape: f32[1,128], index: 4, kind: input, shape index: {}]
  %s5 = inlined_call_operand.hbm [shape: f32[128,128], index: 5, kind: input, shape index: {}]
  %s6 = inlined_call_operand.vmem [shape: f32[1,128], index: 6, kind: input, shape index: {}]
  %s7 = inlined_call_operand.hbm [shape: f32[8,128], index: 7, kind: output, shape index: {}]
  %s8 = sld [smem:[#allocation0]]
  $region62: #{tpu_custom_call.1} parent=0
    _
  %s10 = ssub.s32 1, %s8
  %s11 = scalar_select 0, %s10, %s8
  $region1: #{tpu_custom_call.1} parent=0
    #allocation3 [shape = 'u8[4096]{0}', space=vmem, size = 0x1000, scoped, tag = 'input window, operand 0, single buffered']
    #allocation4 [shape = 's32[1]{0}', space=sflag, size = 0x4, scoped, tag = 'scoped memory for tpu_custom_call.1']
    #allocation5 [shape = 's32[1]{0}', space=sflag, size = 0x4, scoped, tag = 'scoped memory for tpu_custom_call.1']
    #allocation6 [shape = 'u8[65536]{0}', space=vmem, size = 0x10000, scoped, tag = 'input window, operand 1, single buffered']
    #allocation7 [shape = 's32[1]{0}', space=sflag, size = 0x4, scoped, tag = 'scoped memory for tpu_custom_call.1']
    #allocation8 [shape = 'u8[65536]{0}', space=vmem, size = 0x10000, scoped, tag = 'input window, operand 3, single buffered']
    #allocation9 [shape = 'u8[65536]{0}', space=vmem, size = 0x10000, scoped, tag = 'input window, operand 5, single buffered']
    #allocation10 [shape = 's32[1]{0}', space=sflag, size = 0x4, scoped, tag = 'scoped memory for tpu_custom_call.1']
    #allocation11 [shape = 'u8[4096]{0}', space=vmem, size = 0x1000, scoped, tag = 'output window, operand 0, single buffered']
    %12 = vsyncpa [#allocation4], 0
    %13 = vsyncpa [#allocation7], 0
    %14 = vsyncpa [#allocation10], 0
    %15 = vsyncpa [#allocation5], 0
    // Predicated region
    $region2: #{tpu_custom_call.1} parent=1 // pred_check
      _
    $region3: #{tpu_custom_call.1} parent=1 // pred_check_branch
      %17 = sbr.rel (0) target = $region5
    $region4: #{tpu_custom_call.1} parent=1 // pred_region
      %s19 = ssub.s32 128, 128
      %20 = vsyncadd [#allocation4], %s19
      %s22 = sshll.u32 [#allocation3], 4
      %s23 = int_to_ptr.vmem [resolvable:$true] %s22
      %25 = dma.hbm_to_vmem [thread:$0]  %s0, 128, %s23, [#allocation4]
    $region5: #{tpu_custom_call.1} parent=1 // pred_fallthru
      _
    // Predicated region
    $region6: #{tpu_custom_call.1} parent=1 // pred_check
      _
    $region7: #{tpu_custom_call.1} parent=1 // pred_check_branch
      %27 = sbr.rel (0) target = $region9
    $region8: #{tpu_custom_call.1} parent=1 // pred_region
      %s29 = ssub.s32 2048, 2048
      %30 = vsyncadd [#allocation7], %s29
      %s31 = sshll.u32 [#allocation6], 4
      %s32 = int_to_ptr.vmem [resolvable:$true] %s31
      %37 = dma.hbm_to_vmem [thread:$0]  %s1, 2048, %s32, [#allocation7], 128, 128, 8
    $region9: #{tpu_custom_call.1} parent=1 // pred_fallthru
      _
    // Predicated region
    $region10: #{tpu_custom_call.1} parent=1 // pred_check
      _
    $region11: #{tpu_custom_call.1} parent=1 // pred_check_branch
      %39 = sbr.rel (0) target = $region13
    $region12: #{tpu_custom_call.1} parent=1 // pred_region
      _
    $region13: #{tpu_custom_call.1} parent=1 // pred_fallthru
      _
    // Predicated region
    $region14: #{tpu_custom_call.1} parent=1 // pred_check
      _
    $region15: #{tpu_custom_call.1} parent=1 // pred_check_branch
      %41 = sbr.rel (0) target = $region17
    $region16: #{tpu_custom_call.1} parent=1 // pred_region
      %s43 = ssub.s32 2048, 2048
      %44 = vsyncadd [#allocation7], %s43
      %s45 = sshll.u32 [#allocation8], 4
      %s46 = int_to_ptr.vmem [resolvable:$true] %s45
      %51 = dma.hbm_to_vmem [thread:$0]  %s3, 2048, %s46, [#allocation7], 128, 128, 8
    $region17: #{tpu_custom_call.1} parent=1 // pred_fallthru
      _
    // Predicated region
    $region18: #{tpu_custom_call.1} parent=1 // pred_check
      _
    $region19: #{tpu_custom_call.1} parent=1 // pred_check_branch
      %53 = sbr.rel (0) target = $region21
    $region20: #{tpu_custom_call.1} parent=1 // pred_region
      _
    $region21: #{tpu_custom_call.1} parent=1 // pred_fallthru
      _
    // Predicated region
    $region22: #{tpu_custom_call.1} parent=1 // pred_check
      _
    $region23: #{tpu_custom_call.1} parent=1 // pred_check_branch
      %55 = sbr.rel (0) target = $region25
    $region24: #{tpu_custom_call.1} parent=1 // pred_region
      %s57 = ssub.s32 2048, 2048
      %58 = vsyncadd [#allocation10], %s57
      %s59 = sshll.u32 [#allocation9], 4
      %s60 = int_to_ptr.vmem [resolvable:$true] %s59
      %65 = dma.hbm_to_vmem [thread:$0]  %s5, 2048, %s60, [#allocation10], 128, 128, 8
    $region25: #{tpu_custom_call.1} parent=1 // pred_fallthru
      _
    // Predicated region
    $region26: #{tpu_custom_call.1} parent=1 // pred_check
      _
    $region27: #{tpu_custom_call.1} parent=1 // pred_check_branch
      %67 = sbr.rel (0) target = $region29
    $region28: #{tpu_custom_call.1} parent=1 // pred_region
      _
    $region29: #{tpu_custom_call.1} parent=1 // pred_fallthru
      _
    // Predicated region
    $region30: #{tpu_custom_call.1} parent=1 // pred_check
      _
    $region31: #{tpu_custom_call.1} parent=1 // pred_check_branch
      %69 = sbr.rel (0) target = $region33
    $region32: #{tpu_custom_call.1} parent=1 // pred_region
      %70 = dma.done [#allocation4], 128
    $region33: #{tpu_custom_call.1} parent=1 // pred_fallthru
      _
    // Predicated region
    $region34: #{tpu_custom_call.1} parent=1 // pred_check
      _
    $region35: #{tpu_custom_call.1} parent=1 // pred_check_branch
      %72 = sbr.rel (0) target = $region37
    $region36: #{tpu_custom_call.1} parent=1 // pred_region
      %73 = dma.done [#allocation7], 2048
    $region37: #{tpu_custom_call.1} parent=1 // pred_fallthru
      _
    // Predicated region
    $region38: #{tpu_custom_call.1} parent=1 // pred_check
      _
    $region39: #{tpu_custom_call.1} parent=1 // pred_check_branch
      %75 = sbr.rel (0) target = $region41
    $region40: #{tpu_custom_call.1} parent=1 // pred_region
      %76 = dma.done [#allocation7], 2048
    $region41: #{tpu_custom_call.1} parent=1 // pred_fallthru
      _
    // Predicated region
    $region42: #{tpu_custom_call.1} parent=1 // pred_check
      _
    $region43: #{tpu_custom_call.1} parent=1 // pred_check_branch
      %78 = sbr.rel (0) target = $region45
    $region44: #{tpu_custom_call.1} parent=1 // pred_region
      %79 = dma.done [#allocation10], 2048
    $region45: #{tpu_custom_call.1} parent=1 // pred_fallthru
      _
    %p80 = scmp.eq.s32.totalorder 0, 0
    // Predicated region
    $region46: #{tpu_custom_call.1} parent=1 // pred_check
      %p81 = pneg %p80
    $region47: #{tpu_custom_call.1} parent=1 // pred_check_branch
      %83 = sbr.rel (%p81) target = $region49
    $region48: #{tpu_custom_call.1} parent=1 // pred_region
      %84 = vst [vmem:[#allocation2] sm:$0xff] 0.0
    $region49: #{tpu_custom_call.1} parent=1 // pred_fallthru
      _
    %v85 = vld [vmem:[#allocation2] sm:$0xff]
    %v86 = vld [vmem:[#allocation3] sm:$0xff]
    %v87 = vld [vmem:[#allocation6] sm:$0xff]
    %v88 = vld [vmem:[#allocation6 + $0x8] sm:$0xff]
    %v89 = vld [vmem:[#allocation6 + $0x10] sm:$0xff]
    %v90 = vld [vmem:[#allocation6 + $0x18] sm:$0xff]
    %v91 = vld [vmem:[#allocation6 + $0x20] sm:$0xff]
    %v92 = vld [vmem:[#allocation6 + $0x28] sm:$0xff]
    %v93 = vld [vmem:[#allocation6 + $0x30] sm:$0xff]
    %v94 = vld [vmem:[#allocation6 + $0x38] sm:$0xff]
    %v95 = vld [vmem:[#allocation6 + $0x40] sm:$0xff]
    %v96 = vld [vmem:[#allocation6 + $0x48] sm:$0xff]
    %v97 = vld [vmem:[#allocation6 + $0x50] sm:$0xff]
    %v98 = vld [vmem:[#allocation6 + $0x58] sm:$0xff]
    %v99 = vld [vmem:[#allocation6 + $0x60] sm:$0xff]
    %v100 = vld [vmem:[#allocation6 + $0x68] sm:$0xff]
    %v101 = vld [vmem:[#allocation6 + $0x70] sm:$0xff]
    %v102 = vld [vmem:[#allocation6 + $0x78] sm:$0xff]
    %103 = vmatprep.subr.mxu0 0.0
    %104 = vmatpush1.msra.mxu0 %v87
    %105 = vmatprep.subr.mxu0 0.0
    %106 = vmatpush1.msra.mxu0 %v88
    %107 = vmatprep.subr.mxu0 0.0
    %108 = vmatpush1.msra.mxu0 %v89
    %109 = vmatprep.subr.mxu0 0.0
    %110 = vmatpush1.msra.mxu0 %v90
    %111 = vmatprep.subr.mxu0 0.0
    %112 = vmatpush1.msra.mxu0 %v91
    %113 = vmatprep.subr.mxu0 0.0
    %114 = vmatpush1.msra.mxu0 %v92
    %115 = vmatprep.subr.mxu0 0.0
    %116 = vmatpush1.msra.mxu0 %v93
    %117 = vmatprep.subr.mxu0 0.0
    %118 = vmatpush1.msra.mxu0 %v94
    %119 = vmatprep.subr.mxu0 0.0
    %120 = vmatpush1.msra.mxu0 %v95
    %121 = vmatprep.subr.mxu0 0.0
    %122 = vmatpush1.msra.mxu0 %v96
    %123 = vmatprep.subr.mxu0 0.0
    %124 = vmatpush1.msra.mxu0 %v97
    %125 = vmatprep.subr.mxu0 0.0
    %126 = vmatpush1.msra.mxu0 %v98
    %127 = vmatprep.subr.mxu0 0.0
    %128 = vmatpush1.msra.mxu0 %v99
    %129 = vmatprep.subr.mxu0 0.0
    %130 = vmatpush1.msra.mxu0 %v100
    %131 = vmatprep.subr.mxu0 0.0
    %132 = vmatpush1.msra.mxu0 %v101
    %133 = vmatprep.subr.mxu0 0.0
    %134 = vmatpush1.msra.mxu0 %v102
    %135 = vmatprep.subr.mxu0 0.0
    %136 = vmatpush1.msra.mxu0 0.0
    %137 = vmatprep.subr.mxu0 0.0
    %138 = vmatpush1.msra.mxu0 0.0
    %139 = vmatprep.subr.mxu0 0.0
    %140 = vmatpush1.msra.mxu0 0.0
    %141 = vmatprep.subr.mxu0 0.0
    %142 = vmatpush1.msra.mxu0 0.0
    %143 = vmatprep.subr.mxu0 0.0
    %144 = vmatpush1.msra.mxu0 0.0
    %145 = vmatprep.subr.mxu0 0.0
    %146 = vmatpush1.msra.mxu0 0.0
    %147 = vmatprep.subr.mxu0 0.0
    %148 = vmatpush1.msra.mxu0 0.0
    %149 = vmatprep.subr.mxu0 0.0
    %150 = vmatpush1.msra.mxu0 0.0
    %151 = vmatprep.subr.mxu0 0.0
    %152 = vmatpush1.msra.mxu0 0.0
    %153 = vmatprep.subr.mxu0 0.0
    %154 = vmatpush1.msra.mxu0 0.0
    %155 = vmatprep.subr.mxu0 0.0
    %156 = vmatpush1.msra.mxu0 0.0
    %157 = vmatprep.subr.mxu0 0.0
    %158 = vmatpush1.msra.mxu0 0.0
    %159 = vmatprep.subr.mxu0 0.0
    %160 = vmatpush1.msra.mxu0 0.0
    %161 = vmatprep.subr.mxu0 0.0
    %162 = vmatpush1.msra.mxu0 0.0
    %163 = vmatprep.subr.mxu0 0.0
    %164 = vmatpush1.msra.mxu0 0.0
    %165 = vmatprep.subr.mxu0 0.0
    %166 = vmatpush1.msra.mxu0 0.0
    %167 = vmatprep.mubr.f32.mxu0 0.0
    %168 = vmatmul.mubr.f32.gmra.mrb[0].mxu0 %v86
    %v169 = vpop.f32.mrb[0].mxu0
    %v170 = vadd.f32 0.0, %v169
    %v171 = vpop.f32.mrb[0].mxu0
    %172 = vdwg.mxu0
    %v173 = vadd.f32 %v85, %v170
    %174 = vst [vmem:[#allocation2] sm:$0xff] %v173
    // Predicated region
    $region50: #{tpu_custom_call.1} parent=1 // pred_check
      %p175 = pneg %p80
    $region51: #{tpu_custom_call.1} parent=1 // pred_check_branch
      %177 = sbr.rel (%p175) target = $region53
    $region52: #{tpu_custom_call.1} parent=1 // pred_region
      %v178 = vld [vmem:[#allocation2] sm:$0xff]
      %v179 = vld [vmem:[%s2] sm:$0x1]
      %v181 = vlaneseq
      %v182 = vshrl.u32 %v181, 7
      %v183 = vsub.s32 0, %v182
      %v184 = vrot.slane %v179, %v183
      %v186 = vadd.f32 %v178, %v184
      %v187 = vmax.f32 %v186, 0.0
      %v188 = vld [vmem:[#allocation8] sm:$0xff]
      %v189 = vld [vmem:[#allocation8 + $0x8] sm:$0xff]
      %v190 = vld [vmem:[#allocation8 + $0x10] sm:$0xff]
      %v191 = vld [vmem:[#allocation8 + $0x18] sm:$0xff]
      %v192 = vld [vmem:[#allocation8 + $0x20] sm:$0xff]
      %v193 = vld [vmem:[#allocation8 + $0x28] sm:$0xff]
      %v194 = vld [vmem:[#allocation8 + $0x30] sm:$0xff]
      %v195 = vld [vmem:[#allocation8 + $0x38] sm:$0xff]
      %v196 = vld [vmem:[#allocation8 + $0x40] sm:$0xff]
      %v197 = vld [vmem:[#allocation8 + $0x48] sm:$0xff]
      %v198 = vld [vmem:[#allocation8 + $0x50] sm:$0xff]
      %v199 = vld [vmem:[#allocation8 + $0x58] sm:$0xff]
      %v200 = vld [vmem:[#allocation8 + $0x60] sm:$0xff]
      %v201 = vld [vmem:[#allocation8 + $0x68] sm:$0xff]
      %v202 = vld [vmem:[#allocation8 + $0x70] sm:$0xff]
      %v203 = vld [vmem:[#allocation8 + $0x78] sm:$0xff]
      %v204 = vld [vmem:[%s4] sm:$0x1]
      %v206 = vlaneseq
      %v207 = vshrl.u32 %v206, 7
      %v208 = vsub.s32 0, %v207
      %v209 = vrot.slane %v204, %v208
      %211 = vmatprep.subr.mxu0 0.0
      %212 = vmatpush1.msra.mxu0 %v188
      %213 = vmatprep.subr.mxu0 0.0
      %214 = vmatpush1.msra.mxu0 %v189
      %215 = vmatprep.subr.mxu0 0.0
      %216 = vmatpush1.msra.mxu0 %v190
      %217 = vmatprep.subr.mxu0 0.0
      %218 = vmatpush1.msra.mxu0 %v191
      %219 = vmatprep.subr.mxu0 0.0
      %220 = vmatpush1.msra.mxu0 %v192
      %221 = vmatprep.subr.mxu0 0.0
      %222 = vmatpush1.msra.mxu0 %v193
      %223 = vmatprep.subr.mxu0 0.0
      %224 = vmatpush1.msra.mxu0 %v194
      %225 = vmatprep.subr.mxu0 0.0
      %226 = vmatpush1.msra.mxu0 %v195
      %227 = vmatprep.subr.mxu0 0.0
      %228 = vmatpush1.msra.mxu0 %v196
      %229 = vmatprep.subr.mxu0 0.0
      %230 = vmatpush1.msra.mxu0 %v197
      %231 = vmatprep.subr.mxu0 0.0
      %232 = vmatpush1.msra.mxu0 %v198
      %233 = vmatprep.subr.mxu0 0.0
      %234 = vmatpush1.msra.mxu0 %v199
      %235 = vmatprep.subr.mxu0 0.0
      %236 = vmatpush1.msra.mxu0 %v200
      %237 = vmatprep.subr.mxu0 0.0
      %238 = vmatpush1.msra.mxu0 %v201
      %239 = vmatprep.subr.mxu0 0.0
      %240 = vmatpush1.msra.mxu0 %v202
      %241 = vmatprep.subr.mxu0 0.0
      %242 = vmatpush1.msra.mxu0 %v203
      %243 = vmatprep.subr.mxu0 0.0
      %244 = vmatpush1.msra.mxu0 0.0
      %245 = vmatprep.subr.mxu0 0.0
      %246 = vmatpush1.msra.mxu0 0.0
      %247 = vmatprep.subr.mxu0 0.0
      %248 = vmatpush1.msra.mxu0 0.0
      %249 = vmatprep.subr.mxu0 0.0
      %250 = vmatpush1.msra.mxu0 0.0
      %251 = vmatprep.subr.mxu0 0.0
      %252 = vmatpush1.msra.mxu0 0.0
      %253 = vmatprep.subr.mxu0 0.0
      %254 = vmatpush1.msra.mxu0 0.0
      %255 = vmatprep.subr.mxu0 0.0
      %256 = vmatpush1.msra.mxu0 0.0
      %257 = vmatprep.subr.mxu0 0.0
      %258 = vmatpush1.msra.mxu0 0.0
      %259 = vmatprep.subr.mxu0 0.0
      %260 = vmatpush1.msra.mxu0 0.0
      %261 = vmatprep.subr.mxu0 0.0
      %262 = vmatpush1.msra.mxu0 0.0
      %263 = vmatprep.subr.mxu0 0.0
      %264 = vmatpush1.msra.mxu0 0.0
      %265 = vmatprep.subr.mxu0 0.0
      %266 = vmatpush1.msra.mxu0 0.0
      %267 = vmatprep.subr.mxu0 0.0
      %268 = vmatpush1.msra.mxu0 0.0
      %269 = vmatprep.subr.mxu0 0.0
      %270 = vmatpush1.msra.mxu0 0.0
      %271 = vmatprep.subr.mxu0 0.0
      %272 = vmatpush1.msra.mxu0 0.0
      %273 = vmatprep.subr.mxu0 0.0
      %274 = vmatpush1.msra.mxu0 0.0
      %275 = vmatprep.mubr.f32.mxu0 0.0
      %276 = vmatmul.mubr.f32.gmra.mrb[0].mxu0 %v187
      %v277 = vpop.f32.mrb[0].mxu0
      %v278 = vadd.f32 %v209, %v277
      %v279 = vpop.f32.mrb[0].mxu0
      %280 = vdwg.mxu0
      %v281 = vmax.f32 %v278, 0.0
      %v282 = vld [vmem:[#allocation9] sm:$0xff]
      %v283 = vld [vmem:[#allocation9 + $0x8] sm:$0xff]
      %v284 = vld [vmem:[#allocation9 + $0x10] sm:$0xff]
      %v285 = vld [vmem:[#allocation9 + $0x18] sm:$0xff]
      %v286 = vld [vmem:[#allocation9 + $0x20] sm:$0xff]
      %v287 = vld [vmem:[#allocation9 + $0x28] sm:$0xff]
      %v288 = vld [vmem:[#allocation9 + $0x30] sm:$0xff]
      %v289 = vld [vmem:[#allocation9 + $0x38] sm:$0xff]
      %v290 = vld [vmem:[#allocation9 + $0x40] sm:$0xff]
      %v291 = vld [vmem:[#allocation9 + $0x48] sm:$0xff]
      %v292 = vld [vmem:[#allocation9 + $0x50] sm:$0xff]
      %v293 = vld [vmem:[#allocation9 + $0x58] sm:$0xff]
      %v294 = vld [vmem:[#allocation9 + $0x60] sm:$0xff]
      %v295 = vld [vmem:[#allocation9 + $0x68] sm:$0xff]
      %v296 = vld [vmem:[#allocation9 + $0x70] sm:$0xff]
      %v297 = vld [vmem:[#allocation9 + $0x78] sm:$0xff]
      %v298 = vld [vmem:[%s6] sm:$0x1]
      %v300 = vlaneseq
      %v301 = vshrl.u32 %v300, 7
      %v302 = vsub.s32 0, %v301
      %v303 = vrot.slane %v298, %v302
      %305 = vmatprep.subr.mxu0 0.0
      %306 = vmatpush1.msra.mxu0 %v282
      %307 = vmatprep.subr.mxu0 0.0
      %308 = vmatpush1.msra.mxu0 %v283
      %309 = vmatprep.subr.mxu0 0.0
      %310 = vmatpush1.msra.mxu0 %v284
      %311 = vmatprep.subr.mxu0 0.0
      %312 = vmatpush1.msra.mxu0 %v285
      %313 = vmatprep.subr.mxu0 0.0
      %314 = vmatpush1.msra.mxu0 %v286
      %315 = vmatprep.subr.mxu0 0.0
      %316 = vmatpush1.msra.mxu0 %v287
      %317 = vmatprep.subr.mxu0 0.0
      %318 = vmatpush1.msra.mxu0 %v288
      %319 = vmatprep.subr.mxu0 0.0
      %320 = vmatpush1.msra.mxu0 %v289
      %321 = vmatprep.subr.mxu0 0.0
      %322 = vmatpush1.msra.mxu0 %v290
      %323 = vmatprep.subr.mxu0 0.0
      %324 = vmatpush1.msra.mxu0 %v291
      %325 = vmatprep.subr.mxu0 0.0
      %326 = vmatpush1.msra.mxu0 %v292
      %327 = vmatprep.subr.mxu0 0.0
      %328 = vmatpush1.msra.mxu0 %v293
      %329 = vmatprep.subr.mxu0 0.0
      %330 = vmatpush1.msra.mxu0 %v294
      %331 = vmatprep.subr.mxu0 0.0
      %332 = vmatpush1.msra.mxu0 %v295
      %333 = vmatprep.subr.mxu0 0.0
      %334 = vmatpush1.msra.mxu0 %v296
      %335 = vmatprep.subr.mxu0 0.0
      %336 = vmatpush1.msra.mxu0 %v297
      %337 = vmatprep.subr.mxu0 0.0
      %338 = vmatpush1.msra.mxu0 0.0
      %339 = vmatprep.subr.mxu0 0.0
      %340 = vmatpush1.msra.mxu0 0.0
      %341 = vmatprep.subr.mxu0 0.0
      %342 = vmatpush1.msra.mxu0 0.0
      %343 = vmatprep.subr.mxu0 0.0
      %344 = vmatpush1.msra.mxu0 0.0
      %345 = vmatprep.subr.mxu0 0.0
      %346 = vmatpush1.msra.mxu0 0.0
      %347 = vmatprep.subr.mxu0 0.0
      %348 = vmatpush1.msra.mxu0 0.0
      %349 = vmatprep.subr.mxu0 0.0
      %350 = vmatpush1.msra.mxu0 0.0
      %351 = vmatprep.subr.mxu0 0.0
      %352 = vmatpush1.msra.mxu0 0.0
      %353 = vmatprep.subr.mxu0 0.0
      %354 = vmatpush1.msra.mxu0 0.0
      %355 = vmatprep.subr.mxu0 0.0
      %356 = vmatpush1.msra.mxu0 0.0
      %357 = vmatprep.subr.mxu0 0.0
      %358 = vmatpush1.msra.mxu0 0.0
      %359 = vmatprep.subr.mxu0 0.0
      %360 = vmatpush1.msra.mxu0 0.0
      %361 = vmatprep.subr.mxu0 0.0
      %362 = vmatpush1.msra.mxu0 0.0
      %363 = vmatprep.subr.mxu0 0.0
      %364 = vmatpush1.msra.mxu0 0.0
      %365 = vmatprep.subr.mxu0 0.0
      %366 = vmatpush1.msra.mxu0 0.0
      %367 = vmatprep.subr.mxu0 0.0
      %368 = vmatpush1.msra.mxu0 0.0
      %369 = vmatprep.mubr.f32.mxu0 0.0
      %370 = vmatmul.mubr.f32.gmra.mrb[0].mxu0 %v281
      %v371 = vpop.f32.mrb[0].mxu0
      %v372 = vadd.f32 %v303, %v371
      %v373 = vpop.f32.mrb[0].mxu0
      %374 = vdwg.mxu0
      %375 = vst [vmem:[#allocation11] sm:$0xff] %v372
    $region53: #{tpu_custom_call.1} parent=1 // pred_fallthru
      _
    // Predicated region
    $region54: #{tpu_custom_call.1} parent=1 // pred_check
      _
    $region55: #{tpu_custom_call.1} parent=1 // pred_check_branch
      %377 = sbr.rel (0) target = $region57
    $region56: #{tpu_custom_call.1} parent=1 // pred_region
      %s379 = ssub.s32 128, 128
      %380 = vsyncadd [#allocation5], %s379
      %s382 = sshll.u32 [#allocation11], 4
      %s383 = int_to_ptr.vmem [resolvable:$true] %s382
      %385 = dma.vmem_to_hbm [thread:$0]  %s383, 128, %s7, [#allocation5]
    $region57: #{tpu_custom_call.1} parent=1 // pred_fallthru
      _
    // Predicated region
    $region58: #{tpu_custom_call.1} parent=1 // pred_check
      _
    $region59: #{tpu_custom_call.1} parent=1 // pred_check_branch
      %387 = sbr.rel (0) target = $region61
    $region60: #{tpu_custom_call.1} parent=1 // pred_region
      %388 = dma.done [#allocation5], 128
    $region61: #{tpu_custom_call.1} parent=1 // pred_fallthru
      _
    %389 = vsyncpa [#allocation4], 1
    %390 = vsyncpa [#allocation7], 1
    %391 = vsyncpa [#allocation10], 1
    %392 = vsyncpa [#allocation5], 1

// kernel: tpu_custom_call.1
$region0: #{tpu_custom_call.1}
  #allocation0 [shape = 'u32[]', space=smem, size = 0x4, offset = 0x4, fixed_abs, tag = 'smem constant byte address 0x4 - core index']
  #allocation1 [shape = 'u32[144,128]{1,0:T(1,128)}', space=vmem, size = 0x12000, scoped, tag = 'internal scratch']
  #allocation2 [shape = 'f32[8,128]{1,0:T(8,128)}', space=vmem, size = 0x1000, scoped, tag = 'scratch operand']
  %s0 = inlined_call_operand.hbm [shape: f32[8,128], index: 0, kind: input, shape index: {}]
  %s1 = inlined_call_operand.hbm [shape: f32[128,128], index: 1, kind: input, shape index: {}]
  %s2 = inlined_call_operand.vmem [shape: f32[1,128], index: 2, kind: input, shape index: {}]
  %s3 = inlined_call_operand.hbm [shape: f32[128,128], index: 3, kind: input, shape index: {}]
  %s4 = inlined_call_operand.vmem [shape: f32[1,128], index: 4, kind: input, shape index: {}]
  %s5 = inlined_call_operand.hbm [shape: f32[128,128], index: 5, kind: input, shape index: {}]
  %s6 = inlined_call_operand.vmem [shape: f32[1,128], index: 6, kind: input, shape index: {}]
  %s7 = inlined_call_operand.hbm [shape: f32[8,128], index: 7, kind: output, shape index: {}]
  %s8 = sld [smem:[#allocation0]]
  $region62: #{tpu_custom_call.1} parent=0
    _
  %s10 = ssub.s32 1, %s8
  %s11 = scalar_select 0, %s10, %s8
  $region1: #{tpu_custom_call.1} parent=0
    #allocation3 [shape = 'u8[4096]{0}', space=vmem, size = 0x1000, scoped, tag = 'input window, operand 0, single buffered']
    #allocation4 [shape = 's32[1]{0}', space=sflag, size = 0x4, scoped, tag = 'scoped memory for tpu_custom_call.1']
    #allocation5 [shape = 's32[1]{0}', space=sflag, size = 0x4, scoped, tag = 'scoped memory for tpu_custom_call.1']
    #allocation6 [shape = 'u8[65536]{0}', space=vmem, size = 0x10000, scoped, tag = 'input window, operand 1, single buffered']
    #allocation7 [shape = 's32[1]{0}', space=sflag, size = 0x4, scoped, tag = 'scoped memory for tpu_custom_call.1']
    #allocation8 [shape = 'u8[65536]{0}', space=vmem, size = 0x10000, scoped, tag = 'input window, operand 3, single buffered']
    #allocation9 [shape = 'u8[65536]{0}', space=vmem, size = 0x10000, scoped, tag = 'input window, operand 5, single buffered']
    #allocation10 [shape = 's32[1]{0}', space=sflag, size = 0x4, scoped, tag = 'scoped memory for tpu_custom_call.1']
    #allocation11 [shape = 'u8[4096]{0}', space=vmem, size = 0x1000, scoped, tag = 'output window, operand 0, single buffered']
    %12 = vsyncpa [#allocation4], 0
    %13 = vsyncpa [#allocation7], 0
    %14 = vsyncpa [#allocation10], 0
    %15 = vsyncpa [#allocation5], 0
    // Predicated region
    $region2: #{tpu_custom_call.1} parent=1 // pred_check
      _
    $region3: #{tpu_custom_call.1} parent=1 // pred_check_branch
      %17 = sbr.rel (0) target = $region5
    $region4: #{tpu_custom_call.1} parent=1 // pred_region
      %s19 = ssub.s32 128, 128
      %20 = vsyncadd [#allocation4], %s19
      %s22 = sshll.u32 [#allocation3], 4
      %s23 = int_to_ptr.vmem [resolvable:$true] %s22
      %25 = dma.hbm_to_vmem [thread:$0]  %s0, 128, %s23, [#allocation4]
    $region5: #{tpu_custom_call.1} parent=1 // pred_fallthru
      _
    // Predicated region
    $region6: #{tpu_custom_call.1} parent=1 // pred_check
      _
    $region7: #{tpu_custom_call.1} parent=1 // pred_check_branch
      %27 = sbr.rel (0) target = $region9
    $region8: #{tpu_custom_call.1} parent=1 // pred_region
      %s29 = ssub.s32 2048, 2048
      %30 = vsyncadd [#allocation7], %s29
      %s31 = sshll.u32 [#allocation6], 4
      %s32 = int_to_ptr.vmem [resolvable:$true] %s31
      %37 = dma.hbm_to_vmem [thread:$0]  %s1, 2048, %s32, [#allocation7], 128, 128, 8
    $region9: #{tpu_custom_call.1} parent=1 // pred_fallthru
      _
    // Predicated region
    $region10: #{tpu_custom_call.1} parent=1 // pred_check
      _
    $region11: #{tpu_custom_call.1} parent=1 // pred_check_branch
      %39 = sbr.rel (0) target = $region13
    $region12: #{tpu_custom_call.1} parent=1 // pred_region
      _
    $region13: #{tpu_custom_call.1} parent=1 // pred_fallthru
      _
    // Predicated region
    $region14: #{tpu_custom_call.1} parent=1 // pred_check
      _
    $region15: #{tpu_custom_call.1} parent=1 // pred_check_branch
      %41 = sbr.rel (0) target = $region17
    $region16: #{tpu_custom_call.1} parent=1 // pred_region
      %s43 = ssub.s32 2048, 2048
      %44 = vsyncadd [#allocation7], %s43
      %s45 = sshll.u32 [#allocation8], 4
      %s46 = int_to_ptr.vmem [resolvable:$true] %s45
      %51 = dma.hbm_to_vmem [thread:$0]  %s3, 2048, %s46, [#allocation7], 128, 128, 8
    $region17: #{tpu_custom_call.1} parent=1 // pred_fallthru
      _
    // Predicated region
    $region18: #{tpu_custom_call.1} parent=1 // pred_check
      _
    $region19: #{tpu_custom_call.1} parent=1 // pred_check_branch
      %53 = sbr.rel (0) target = $region21
    $region20: #{tpu_custom_call.1} parent=1 // pred_region
      _
    $region21: #{tpu_custom_call.1} parent=1 // pred_fallthru
      _
    // Predicated region
    $region22: #{tpu_custom_call.1} parent=1 // pred_check
      _
    $region23: #{tpu_custom_call.1} parent=1 // pred_check_branch
      %55 = sbr.rel (0) target = $region25
    $region24: #{tpu_custom_call.1} parent=1 // pred_region
      %s57 = ssub.s32 2048, 2048
      %58 = vsyncadd [#allocation10], %s57
      %s59 = sshll.u32 [#allocation9], 4
      %s60 = int_to_ptr.vmem [resolvable:$true] %s59
      %65 = dma.hbm_to_vmem [thread:$0]  %s5, 2048, %s60, [#allocation10], 128, 128, 8
    $region25: #{tpu_custom_call.1} parent=1 // pred_fallthru
      _
    // Predicated region
    $region26: #{tpu_custom_call.1} parent=1 // pred_check
      _
    $region27: #{tpu_custom_call.1} parent=1 // pred_check_branch
      %67 = sbr.rel (0) target = $region29
    $region28: #{tpu_custom_call.1} parent=1 // pred_region
      _
    $region29: #{tpu_custom_call.1} parent=1 // pred_fallthru
      _
    // Predicated region
    $region30: #{tpu_custom_call.1} parent=1 // pred_check
      _
    $region31: #{tpu_custom_call.1} parent=1 // pred_check_branch
      %69 = sbr.rel (0) target = $region33
    $region32: #{tpu_custom_call.1} parent=1 // pred_region
      %70 = dma.done [#allocation4], 128
    $region33: #{tpu_custom_call.1} parent=1 // pred_fallthru
      _
    // Predicated region
    $region34: #{tpu_custom_call.1} parent=1 // pred_check
      _
    $region35: #{tpu_custom_call.1} parent=1 // pred_check_branch
      %72 = sbr.rel (0) target = $region37
    $region36: #{tpu_custom_call.1} parent=1 // pred_region
      %73 = dma.done [#allocation7], 2048
    $region37: #{tpu_custom_call.1} parent=1 // pred_fallthru
      _
    // Predicated region
    $region38: #{tpu_custom_call.1} parent=1 // pred_check
      _
    $region39: #{tpu_custom_call.1} parent=1 // pred_check_branch
      %75 = sbr.rel (0) target = $region41
    $region40: #{tpu_custom_call.1} parent=1 // pred_region
      %76 = dma.done [#allocation7], 2048
    $region41: #{tpu_custom_call.1} parent=1 // pred_fallthru
      _
    // Predicated region
    $region42: #{tpu_custom_call.1} parent=1 // pred_check
      _
    $region43: #{tpu_custom_call.1} parent=1 // pred_check_branch
      %78 = sbr.rel (0) target = $region45
    $region44: #{tpu_custom_call.1} parent=1 // pred_region
      %79 = dma.done [#allocation10], 2048
    $region45: #{tpu_custom_call.1} parent=1 // pred_fallthru
      _
    %p80 = scmp.eq.s32.totalorder 0, 0
    // Predicated region
    $region46: #{tpu_custom_call.1} parent=1 // pred_check
      %p81 = pneg %p80
    $region47: #{tpu_custom_call.1} parent=1 // pred_check_branch
      %83 = sbr.rel (%p81) target = $region49
    $region48: #{tpu_custom_call.1} parent=1 // pred_region
      %84 = vst [vmem:[#allocation2] sm:$0xff] 0.0
    $region49: #{tpu_custom_call.1} parent=1 // pred_fallthru
      _
    %v85 = vld [vmem:[#allocation2] sm:$0xff]
    %v86 = vld [vmem:[#allocation3] sm:$0xff]
    %v87 = vld [vmem:[#allocation6] sm:$0xff]
    %v88 = vld [vmem:[#allocation6 + $0x8] sm:$0xff]
    %v89 = vld [vmem:[#allocation6 + $0x10] sm:$0xff]
    %v90 = vld [vmem:[#allocation6 + $0x18] sm:$0xff]
    %v91 = vld [vmem:[#allocation6 + $0x20] sm:$0xff]
    %v92 = vld [vmem:[#allocation6 + $0x28] sm:$0xff]
    %v93 = vld [vmem:[#allocation6 + $0x30] sm:$0xff]
    %v94 = vld [vmem:[#allocation6 + $0x38] sm:$0xff]
    %v95 = vld [vmem:[#allocation6 + $0x40] sm:$0xff]
    %v96 = vld [vmem:[#allocation6 + $0x48] sm:$0xff]
    %v97 = vld [vmem:[#allocation6 + $0x50] sm:$0xff]
    %v98 = vld [vmem:[#allocation6 + $0x58] sm:$0xff]
    %v99 = vld [vmem:[#allocation6 + $0x60] sm:$0xff]
    %v100 = vld [vmem:[#allocation6 + $0x68] sm:$0xff]
    %v101 = vld [vmem:[#allocation6 + $0x70] sm:$0xff]
    %v102 = vld [vmem:[#allocation6 + $0x78] sm:$0xff]
    %103 = vmatprep.subr.mxu0 0.0
    %104 = vmatpush1.msra.mxu0 %v87
    %105 = vmatprep.subr.mxu0 0.0
    %106 = vmatpush1.msra.mxu0 %v88
    %107 = vmatprep.subr.mxu0 0.0
    %108 = vmatpush1.msra.mxu0 %v89
    %109 = vmatprep.subr.mxu0 0.0
    %110 = vmatpush1.msra.mxu0 %v90
    %111 = vmatprep.subr.mxu0 0.0
    %112 = vmatpush1.msra.mxu0 %v91
    %113 = vmatprep.subr.mxu0 0.0
    %114 = vmatpush1.msra.mxu0 %v92
    %115 = vmatprep.subr.mxu0 0.0
    %116 = vmatpush1.msra.mxu0 %v93
    %117 = vmatprep.subr.mxu0 0.0
    %118 = vmatpush1.msra.mxu0 %v94
    %119 = vmatprep.subr.mxu0 0.0
    %120 = vmatpush1.msra.mxu0 %v95
    %121 = vmatprep.subr.mxu0 0.0
    %122 = vmatpush1.msra.mxu0 %v96
    %123 = vmatprep.subr.mxu0 0.0
    %124 = vmatpush1.msra.mxu0 %v97
    %125 = vmatprep.subr.mxu0 0.0
    %126 = vmatpush1.msra.mxu0 %v98
    %127 = vmatprep.subr.mxu0 0.0
    %128 = vmatpush1.msra.mxu0 %v99
    %129 = vmatprep.subr.mxu0 0.0
    %130 = vmatpush1.msra.mxu0 %v100
    %131 = vmatprep.subr.mxu0 0.0
    %132 = vmatpush1.msra.mxu0 %v101
    %133 = vmatprep.subr.mxu0 0.0
    %134 = vmatpush1.msra.mxu0 %v102
    %135 = vmatprep.subr.mxu0 0.0
    %136 = vmatpush1.msra.mxu0 0.0
    %137 = vmatprep.subr.mxu0 0.0
    %138 = vmatpush1.msra.mxu0 0.0
    %139 = vmatprep.subr.mxu0 0.0
    %140 = vmatpush1.msra.mxu0 0.0
    %141 = vmatprep.subr.mxu0 0.0
    %142 = vmatpush1.msra.mxu0 0.0
    %143 = vmatprep.subr.mxu0 0.0
    %144 = vmatpush1.msra.mxu0 0.0
    %145 = vmatprep.subr.mxu0 0.0
    %146 = vmatpush1.msra.mxu0 0.0
    %147 = vmatprep.subr.mxu0 0.0
    %148 = vmatpush1.msra.mxu0 0.0
    %149 = vmatprep.subr.mxu0 0.0
    %150 = vmatpush1.msra.mxu0 0.0
    %151 = vmatprep.subr.mxu0 0.0
    %152 = vmatpush1.msra.mxu0 0.0
    %153 = vmatprep.subr.mxu0 0.0
    %154 = vmatpush1.msra.mxu0 0.0
    %155 = vmatprep.subr.mxu0 0.0
    %156 = vmatpush1.msra.mxu0 0.0
    %157 = vmatprep.subr.mxu0 0.0
    %158 = vmatpush1.msra.mxu0 0.0
    %159 = vmatprep.subr.mxu0 0.0
    %160 = vmatpush1.msra.mxu0 0.0
    %161 = vmatprep.subr.mxu0 0.0
    %162 = vmatpush1.msra.mxu0 0.0
    %163 = vmatprep.subr.mxu0 0.0
    %164 = vmatpush1.msra.mxu0 0.0
    %165 = vmatprep.subr.mxu0 0.0
    %166 = vmatpush1.msra.mxu0 0.0
    %167 = vmatprep.mubr.f32.mxu0 0.0
    %168 = vmatmul.mubr.f32.gmra.mrb[0].mxu0 %v86
    %v169 = vpop.f32.mrb[0].mxu0
    %v170 = vadd.f32 0.0, %v169
    %v171 = vpop.f32.mrb[0].mxu0
    %172 = vdwg.mxu0
    %v173 = vadd.f32 %v85, %v170
    %174 = vst [vmem:[#allocation2] sm:$0xff] %v173
    // Predicated region
    $region50: #{tpu_custom_call.1} parent=1 // pred_check
      %p175 = pneg %p80
    $region51: #{tpu_custom_call.1} parent=1 // pred_check_branch
      %177 = sbr.rel (%p175) target = $region53
    $region52: #{tpu_custom_call.1} parent=1 // pred_region
      %v178 = vld [vmem:[#allocation2] sm:$0xff]
      %v179 = vld [vmem:[%s2] sm:$0x1]
      %v181 = vlaneseq
      %v182 = vshrl.u32 %v181, 7
      %v183 = vsub.s32 0, %v182
      %v184 = vrot.slane %v179, %v183
      %v186 = vadd.f32 %v178, %v184
      %v187 = vmax.f32 %v186, 0.0
      %v188 = vld [vmem:[#allocation8] sm:$0xff]
      %v189 = vld [vmem:[#allocation8 + $0x8] sm:$0xff]
      %v190 = vld [vmem:[#allocation8 + $0x10] sm:$0xff]
      %v191 = vld [vmem:[#allocation8 + $0x18] sm:$0xff]
      %v192 = vld [vmem:[#allocation8 + $0x20] sm:$0xff]
      %v193 = vld [vmem:[#allocation8 + $0x28] sm:$0xff]
      %v194 = vld [vmem:[#allocation8 + $0x30] sm:$0xff]
      %v195 = vld [vmem:[#allocation8 + $0x38] sm:$0xff]
      %v196 = vld [vmem:[#allocation8 + $0x40] sm:$0xff]
      %v197 = vld [vmem:[#allocation8 + $0x48] sm:$0xff]
      %v198 = vld [vmem:[#allocation8 + $0x50] sm:$0xff]
      %v199 = vld [vmem:[#allocation8 + $0x58] sm:$0xff]
      %v200 = vld [vmem:[#allocation8 + $0x60] sm:$0xff]
      %v201 = vld [vmem:[#allocation8 + $0x68] sm:$0xff]
      %v202 = vld [vmem:[#allocation8 + $0x70] sm:$0xff]
      %v203 = vld [vmem:[#allocation8 + $0x78] sm:$0xff]
      %v204 = vld [vmem:[%s4] sm:$0x1]
      %v206 = vlaneseq
      %v207 = vshrl.u32 %v206, 7
      %v208 = vsub.s32 0, %v207
      %v209 = vrot.slane %v204, %v208
      %211 = vmatprep.subr.mxu0 0.0
      %212 = vmatpush1.msra.mxu0 %v188
      %213 = vmatprep.subr.mxu0 0.0
      %214 = vmatpush1.msra.mxu0 %v189
      %215 = vmatprep.subr.mxu0 0.0
      %216 = vmatpush1.msra.mxu0 %v190
      %217 = vmatprep.subr.mxu0 0.0
      %218 = vmatpush1.msra.mxu0 %v191
      %219 = vmatprep.subr.mxu0 0.0
      %220 = vmatpush1.msra.mxu0 %v192
      %221 = vmatprep.subr.mxu0 0.0
      %222 = vmatpush1.msra.mxu0 %v193
      %223 = vmatprep.subr.mxu0 0.0
      %224 = vmatpush1.msra.mxu0 %v194
      %225 = vmatprep.subr.mxu0 0.0
      %226 = vmatpush1.msra.mxu0 %v195
      %227 = vmatprep.subr.mxu0 0.0
      %228 = vmatpush1.msra.mxu0 %v196
      %229 = vmatprep.subr.mxu0 0.0
      %230 = vmatpush1.msra.mxu0 %v197
      %231 = vmatprep.subr.mxu0 0.0
      %232 = vmatpush1.msra.mxu0 %v198
      %233 = vmatprep.subr.mxu0 0.0
      %234 = vmatpush1.msra.mxu0 %v199
      %235 = vmatprep.subr.mxu0 0.0
      %236 = vmatpush1.msra.mxu0 %v200
      %237 = vmatprep.subr.mxu0 0.0
      %238 = vmatpush1.msra.mxu0 %v201
      %239 = vmatprep.subr.mxu0 0.0
      %240 = vmatpush1.msra.mxu0 %v202
      %241 = vmatprep.subr.mxu0 0.0
      %242 = vmatpush1.msra.mxu0 %v203
      %243 = vmatprep.subr.mxu0 0.0
      %244 = vmatpush1.msra.mxu0 0.0
      %245 = vmatprep.subr.mxu0 0.0
      %246 = vmatpush1.msra.mxu0 0.0
      %247 = vmatprep.subr.mxu0 0.0
      %248 = vmatpush1.msra.mxu0 0.0
      %249 = vmatprep.subr.mxu0 0.0
      %250 = vmatpush1.msra.mxu0 0.0
      %251 = vmatprep.subr.mxu0 0.0
      %252 = vmatpush1.msra.mxu0 0.0
      %253 = vmatprep.subr.mxu0 0.0
      %254 = vmatpush1.msra.mxu0 0.0
      %255 = vmatprep.subr.mxu0 0.0
      %256 = vmatpush1.msra.mxu0 0.0
      %257 = vmatprep.subr.mxu0 0.0
      %258 = vmatpush1.msra.mxu0 0.0
      %259 = vmatprep.subr.mxu0 0.0
      %260 = vmatpush1.msra.mxu0 0.0
      %261 = vmatprep.subr.mxu0 0.0
      %262 = vmatpush1.msra.mxu0 0.0
      %263 = vmatprep.subr.mxu0 0.0
      %264 = vmatpush1.msra.mxu0 0.0
      %265 = vmatprep.subr.mxu0 0.0
      %266 = vmatpush1.msra.mxu0 0.0
      %267 = vmatprep.subr.mxu0 0.0
      %268 = vmatpush1.msra.mxu0 0.0
      %269 = vmatprep.subr.mxu0 0.0
      %270 = vmatpush1.msra.mxu0 0.0
      %271 = vmatprep.subr.mxu0 0.0
      %272 = vmatpush1.msra.mxu0 0.0
      %273 = vmatprep.subr.mxu0 0.0
      %274 = vmatpush1.msra.mxu0 0.0
      %275 = vmatprep.mubr.f32.mxu0 0.0
      %276 = vmatmul.mubr.f32.gmra.mrb[0].mxu0 %v187
      %v277 = vpop.f32.mrb[0].mxu0
      %v278 = vadd.f32 %v209, %v277
      %v279 = vpop.f32.mrb[0].mxu0
      %280 = vdwg.mxu0
      %v281 = vmax.f32 %v278, 0.0
      %v282 = vld [vmem:[#allocation9] sm:$0xff]
      %v283 = vld [vmem:[#allocation9 + $0x8] sm:$0xff]
      %v284 = vld [vmem:[#allocation9 + $0x10] sm:$0xff]
      %v285 = vld [vmem:[#allocation9 + $0x18] sm:$0xff]
      %v286 = vld [vmem:[#allocation9 + $0x20] sm:$0xff]
      %v287 = vld [vmem:[#allocation9 + $0x28] sm:$0xff]
      %v288 = vld [vmem:[#allocation9 + $0x30] sm:$0xff]
      %v289 = vld [vmem:[#allocation9 + $0x38] sm:$0xff]
      %v290 = vld [vmem:[#allocation9 + $0x40] sm:$0xff]
      %v291 = vld [vmem:[#allocation9 + $0x48] sm:$0xff]
      %v292 = vld [vmem:[#allocation9 + $0x50] sm:$0xff]
      %v293 = vld [vmem:[#allocation9 + $0x58] sm:$0xff]
      %v294 = vld [vmem:[#allocation9 + $0x60] sm:$0xff]
      %v295 = vld [vmem:[#allocation9 + $0x68] sm:$0xff]
      %v296 = vld [vmem:[#allocation9 + $0x70] sm:$0xff]
      %v297 = vld [vmem:[#allocation9 + $0x78] sm:$0xff]
      %v298 = vld [vmem:[%s6] sm:$0x1]
      %v300 = vlaneseq
      %v301 = vshrl.u32 %v300, 7
      %v302 = vsub.s32 0, %v301
      %v303 = vrot.slane %v298, %v302
      %305 = vmatprep.subr.mxu0 0.0
      %306 = vmatpush1.msra.mxu0 %v282
      %307 = vmatprep.subr.mxu0 0.0
      %308 = vmatpush1.msra.mxu0 %v283
      %309 = vmatprep.subr.mxu0 0.0
      %310 = vmatpush1.msra.mxu0 %v284
      %311 = vmatprep.subr.mxu0 0.0
      %312 = vmatpush1.msra.mxu0 %v285
      %313 = vmatprep.subr.mxu0 0.0
      %314 = vmatpush1.msra.mxu0 %v286
      %315 = vmatprep.subr.mxu0 0.0
      %316 = vmatpush1.msra.mxu0 %v287
      %317 = vmatprep.subr.mxu0 0.0
      %318 = vmatpush1.msra.mxu0 %v288
      %319 = vmatprep.subr.mxu0 0.0
      %320 = vmatpush1.msra.mxu0 %v289
      %321 = vmatprep.subr.mxu0 0.0
      %322 = vmatpush1.msra.mxu0 %v290
      %323 = vmatprep.subr.mxu0 0.0
      %324 = vmatpush1.msra.mxu0 %v291
      %325 = vmatprep.subr.mxu0 0.0
      %326 = vmatpush1.msra.mxu0 %v292
      %327 = vmatprep.subr.mxu0 0.0
      %328 = vmatpush1.msra.mxu0 %v293
      %329 = vmatprep.subr.mxu0 0.0
      %330 = vmatpush1.msra.mxu0 %v294
      %331 = vmatprep.subr.mxu0 0.0
      %332 = vmatpush1.msra.mxu0 %v295
      %333 = vmatprep.subr.mxu0 0.0
      %334 = vmatpush1.msra.mxu0 %v296
      %335 = vmatprep.subr.mxu0 0.0
      %336 = vmatpush1.msra.mxu0 %v297
      %337 = vmatprep.subr.mxu0 0.0
      %338 = vmatpush1.msra.mxu0 0.0
      %339 = vmatprep.subr.mxu0 0.0
      %340 = vmatpush1.msra.mxu0 0.0
      %341 = vmatprep.subr.mxu0 0.0
      %342 = vmatpush1.msra.mxu0 0.0
      %343 = vmatprep.subr.mxu0 0.0
      %344 = vmatpush1.msra.mxu0 0.0
      %345 = vmatprep.subr.mxu0 0.0
      %346 = vmatpush1.msra.mxu0 0.0
      %347 = vmatprep.subr.mxu0 0.0
      %348 = vmatpush1.msra.mxu0 0.0
      %349 = vmatprep.subr.mxu0 0.0
      %350 = vmatpush1.msra.mxu0 0.0
      %351 = vmatprep.subr.mxu0 0.0
      %352 = vmatpush1.msra.mxu0 0.0
      %353 = vmatprep.subr.mxu0 0.0
      %354 = vmatpush1.msra.mxu0 0.0
      %355 = vmatprep.subr.mxu0 0.0
      %356 = vmatpush1.msra.mxu0 0.0
      %357 = vmatprep.subr.mxu0 0.0
      %358 = vmatpush1.msra.mxu0 0.0
      %359 = vmatprep.subr.mxu0 0.0
      %360 = vmatpush1.msra.mxu0 0.0
      %361 = vmatprep.subr.mxu0 0.0
      %362 = vmatpush1.msra.mxu0 0.0
      %363 = vmatprep.subr.mxu0 0.0
      %364 = vmatpush1.msra.mxu0 0.0
      %365 = vmatprep.subr.mxu0 0.0
      %366 = vmatpush1.msra.mxu0 0.0
      %367 = vmatprep.subr.mxu0 0.0
      %368 = vmatpush1.msra.mxu0 0.0
      %369 = vmatprep.mubr.f32.mxu0 0.0
      %370 = vmatmul.mubr.f32.gmra.mrb[0].mxu0 %v281
      %v371 = vpop.f32.mrb[0].mxu0
      %v372 = vadd.f32 %v303, %v371
      %v373 = vpop.f32.mrb[0].mxu0
      %374 = vdwg.mxu0
      %375 = vst [vmem:[#allocation11] sm:$0xff] %v372
    $region53: #{tpu_custom_call.1} parent=1 // pred_fallthru
      _
    // Predicated region
    $region54: #{tpu_custom_call.1} parent=1 // pred_check
      _
    $region55: #{tpu_custom_call.1} parent=1 // pred_check_branch
      %377 = sbr.rel (0) target = $region57
    $region56: #{tpu_custom_call.1} parent=1 // pred_region
      %s379 = ssub.s32 128, 128
      %380 = vsyncadd [#allocation5], %s379
      %s382 = sshll.u32 [#allocation11], 4
      %s383 = int_to_ptr.vmem [resolvable:$true] %s382
      %385 = dma.vmem_to_hbm [thread:$0]  %s383, 128, %s7, [#allocation5]
    $region57: #{tpu_custom_call.1} parent=1 // pred_fallthru
      _
    // Predicated region
    $region58: #{tpu_custom_call.1} parent=1 // pred_check
      _
    $region59: #{tpu_custom_call.1} parent=1 // pred_check_branch
      %387 = sbr.rel (0) target = $region61
    $region60: #{tpu_custom_call.1} parent=1 // pred_region
      %388 = dma.done [#allocation5], 128
    $region61: #{tpu_custom_call.1} parent=1 // pred_fallthru
      _
    %389 = vsyncpa [#allocation4], 1
    %390 = vsyncpa [#allocation7], 1
    %391 = vsyncpa [#allocation10], 1
    %392 = vsyncpa [#allocation5], 1

</llo_original>
